<compile_context>
chip_gen: v6e
topology: v6e:2x2x1
jax: 0.10.0
libtpu: 0.0.40
codegen_flags: <defaults>
</compile_context>

<pallas_src>
import jax
import jax.numpy as jnp
from jax.experimental import pallas as pl
from jax.experimental.pallas import tpu as pltpu

KSIZE = 7
PAD = KSIZE // 2


# ---------------------------------------------------------------------------
# kernels
# ---------------------------------------------------------------------------
def cbam1d_matmul_kernel(x_ref, w1_ref, w2_ref, cm_ref, o_ref):
    """Spatial attention via a precomputed banded (C, C) matrix (small/medium C)."""
    x = x_ref[...]                                                     # (bm, C)
    h = jnp.maximum(jnp.dot(x, w1_ref[...],
                            preferred_element_type=jnp.float32), 0.0)  # (bm, H)
    a = jax.nn.sigmoid(jnp.dot(h.astype(w2_ref.dtype), w2_ref[...],
                               preferred_element_type=jnp.float32))    # (bm, C)
    y = x.astype(jnp.float32) * (a + a)                                # (bm, C)
    s = jax.nn.sigmoid(jnp.dot(y.astype(cm_ref.dtype), cm_ref[...],
                               preferred_element_type=jnp.float32))    # (bm, C)
    o_ref[...] = (y * s).astype(o_ref.dtype)


def cbam1d_roll_kernel(x_ref, w1_ref, w2_ref, wm_ref, o_ref):
    """Spatial attention via 7 shifted multiply-adds (large C: no C^2 matrix).

    wm_ref is a premasked (KSIZE, C) f32 weight table: wm[k, c] = wk[k] if the tap's
    source channel c + k - PAD is in range, else 0 -- so no per-tap iota/compare/select.
    """
    x = x_ref[...]                                                     # (bm, C)
    h = jnp.maximum(jnp.dot(x, w1_ref[...],
                            preferred_element_type=jnp.float32), 0.0)
    a = jax.nn.sigmoid(jnp.dot(h.astype(w2_ref.dtype), w2_ref[...],
                               preferred_element_type=jnp.float32))
    y = x.astype(jnp.float32) * (a + a)

    C = y.shape[-1]
    wm = wm_ref[...]                                                   # (KSIZE, C)
    s = jnp.zeros_like(y)
    for k in range(KSIZE):
        sh = (PAD - k) % C                       # non-negative lane rotation
        z = pltpu.roll(y, shift=sh, axis=1) if sh else y
        s = s + z * wm[k:k + 1, :]
    o_ref[...] = (y * jax.nn.sigmoid(s)).astype(o_ref.dtype)


# ---------------------------------------------------------------------------
# wrapper helpers
# ---------------------------------------------------------------------------
def _round_up(v, m):
    return ((v + m - 1) // m) * m


def _device_kind():
    try:
        return jax.devices()[0].device_kind.lower()
    except Exception:
        return ""


def _vmem_limit_for(kind):
    if "v7" in kind:
        return 28 * 1024 * 1024      # 64 MiB physical per TC -> leave pipeline headroom
    if "v5" in kind:
        return 48 * 1024 * 1024      # 128 MiB physical; well past the 16 MiB scoped default
    return 64 * 1024 * 1024          # v6e & other 128 MiB-class parts


def _roll_crossover(kind):
    # On v6e/v7x the banded C*C matmul rides the otherwise-idle MXU (kernel is HBM-bound),
    # so keep it up to C~1024.  v5e's MXU is ~4.7x slower -> switch to the XLU roll path earlier.
    return 256 if "v5" in kind else 1024


def _choose_block_b(B, C, itemsize, budget, const_bytes):
    """Byte-targeted batch block: >=2 grid steps when B allows, divisor of B when possible."""
    sub = 8 * (4 // max(1, itemsize))            # 8 rows f32, 16 rows bf16 (sublane packing)
    if B <= sub:
        return B                                 # single full-dim block (allowed by Pallas)

    # Per-row VMEM: double-buffered x/out blocks + ~6 f32-wide in-kernel temporaries.
    per_row = 2 * 2 * itemsize * C + 6 * 4 * C
    cap = max(sub, (budget - const_bytes) // per_row)
    # Target ~2 MiB of x per block (>= 512 rows) so per-step pipeline overhead is amortized.
    target = max(512, (2 << 20) // (C * itemsize))
    blk = min(int(cap), int(target), B)
    # Keep >= 2 grid steps (megacore / v7x dual-TC) whenever the batch allows.
    blk = min(blk, _round_up((B + 1) // 2, sub))
    blk = max(sub, (blk // sub) * sub)

    # Prefer a sublane-aligned divisor of B within 2x of the target -> no ragged last block.
    for cand in range(blk, max(sub, blk // 2) - 1, -sub):
        if B % cand == 0:
            return cand
    return blk                                   # ragged last block: Pallas clamps the DMAs


def _banded_conv_matrix(wk, C):
    # M[j, c] = wk[j - c + PAD] when 0 <= j - c + PAD < KSIZE, else 0, so that
    # (y @ M)[:, c] = sum_k wk[k] * y[:, c + k - PAD]   (zero-padded Conv1d).
    row = jax.lax.broadcasted_iota(jnp.int32, (C, C), 0)
    col = jax.lax.broadcasted_iota(jnp.int32, (C, C), 1)
    d = row - col + PAD
    mask = (d >= 0) & (d < KSIZE)
    return jnp.where(mask, wk[jnp.clip(d, 0, KSIZE - 1)], 0.0)


def _masked_conv_weights(wk, C):
    # wm[k, c] = wk[k] if 0 <= c + k - PAD < C else 0   (edge taps pre-zeroed)
    col = jnp.arange(C)[None, :]
    kk = jnp.arange(KSIZE)[:, None]
    src = col + kk - PAD
    valid = (src >= 0) & (src < C)
    return jnp.where(valid, wk[:, None], 0.0).astype(jnp.float32)


# ---------------------------------------------------------------------------
# public entry point
# ---------------------------------------------------------------------------
def cbam1d(x, w1_t, w2_t, w_conv, *, block_b=None, use_roll_conv=None,
           vmem_limit_bytes=None):
    B, C = x.shape
    Cw, H = w1_t.shape
    assert Cw == C and w2_t.shape == (H, C) and w_conv.shape == (2, KSIZE)

    kind = _device_kind()
    if vmem_limit_bytes is None:
        vmem_limit_bytes = _vmem_limit_for(kind)
    if use_roll_conv is None:
        use_roll_conv = C >= _roll_crossover(kind)

    itemsize = x.dtype.itemsize
    w1 = w1_t.astype(x.dtype)
    w2 = w2_t.astype(x.dtype)
    wk = (w_conv[0] + w_conv[1]).astype(jnp.float32)   # both conv in-channels see y

    # Grid-invariant blocks are still double-buffered by Pallas -> count them x2.
    const_bytes = 2 * itemsize * (w1.size + w2.size)
    if use_roll_conv:
        const_bytes += 2 * 4 * 8 * C                   # (KSIZE, C) f32, sublane-padded
    else:
        const_bytes += 2 * itemsize * C * C            # banded conv matrix

    if block_b is None:
        budget = int(vmem_limit_bytes) - (2 << 20)     # headroom for internal scratch
        block_b = _choose_block_b(B, C, itemsize, budget, const_bytes)

    grid = (int(pl.cdiv(B, block_b)),)                 # last block may overrun: rows are
                                                       # per-row independent, tail is dropped
    x_spec = pl.BlockSpec((block_b, C), lambda i: (i, 0))
    w1_spec = pl.BlockSpec((C, H), lambda i: (0, 0))
    w2_spec = pl.BlockSpec((H, C), lambda i: (0, 0))
    out_spec = pl.BlockSpec((block_b, C), lambda i: (i, 0))

    flops = 4 * B * C * H + 6 * B * C
    transcendentals = 2 * B * C
    bytes_accessed = itemsize * (2 * B * C + 2 * C * H)

    if use_roll_conv:
        kernel = cbam1d_roll_kernel
        wm = _masked_conv_weights(wk, C)               # built once, outside the kernel
        extra_in = [wm]
        extra_spec = [pl.BlockSpec((KSIZE, C), lambda i: (0, 0))]
        flops += 2 * KSIZE * B * C
        bytes_accessed += 4 * KSIZE * C
    else:
        kernel = cbam1d_matmul_kernel
        conv_mat = _banded_conv_matrix(wk, C).astype(x.dtype)   # built once, outside kernel
        extra_in = [conv_mat]
        extra_spec = [pl.BlockSpec((C, C), lambda i: (0, 0))]
        flops += 2 * B * C * C
        bytes_accessed += itemsize * C * C

    return pl.pallas_call(
        kernel,
        out_shape=jax.ShapeDtypeStruct((B, C), x.dtype),
        grid=grid,
        in_specs=[x_spec, w1_spec, w2_spec] + extra_spec,
        out_specs=out_spec,
        compiler_params=pltpu.CompilerParams(
            dimension_semantics=("parallel",),
            vmem_limit_bytes=int(vmem_limit_bytes)),
        cost_estimate=pl.CostEstimate(
            flops=int(flops),
            transcendentals=int(transcendentals),
            bytes_accessed=int(bytes_accessed)),
    )(x, w1, w2, *extra_in)


# ---------------------------------------------------------------------------
# pure-JAX reference of the exact PyTorch semantics
# ---------------------------------------------------------------------------
def cbam1d_reference(x, w1_t, w2_t, w_conv):
    a = jax.nn.sigmoid(jnp.maximum(x @ w1_t, 0.0) @ w2_t)
    y = x * (a + a)
    wk = w_conv[0] + w_conv[1]
    yp = jnp.pad(y, ((0, 0), (PAD, PAD)))
    s = sum(wk[k] * yp[:, k:k + y.shape[1]] for k in range(KSIZE))
    return y * jax.nn.sigmoid(s)


if __name__ == "__main__":
    B, C, reduction = 16, 128, 16          # lane-dense C (multiple of 128), hidden = 8
    H = C // reduction
    key = jax.random.PRNGKey(0)
    kx, k1, k2, kc = jax.random.split(key, 4)

    x = jax.random.normal(kx, (B, C), jnp.float32)
    # nn.Linear(C, H, bias=False).weight is (H, C); pass its transpose for x @ W.T
    w1_t = (jax.random.normal(k1, (H, C), jnp.float32) * 0.1).T    # (C, H)
    # nn.Linear(H, C, bias=False).weight is (C, H); pass its transpose
    w2_t = (jax.random.normal(k2, (C, H), jnp.float32) * 0.1).T    # (H, C)
    # nn.Conv1d(2, 1, 7, bias=False).weight is (1, 2, 7); pass as (2, 7)
    w_conv = (jax.random.normal(kc, (1, 2, KSIZE), jnp.float32) * 0.1)[0]

    ref = cbam1d_reference(x, w1_t, w2_t, w_conv)

    # default path for C=128: precomputed banded conv matrix on the MXU
    out = jax.block_until_ready(cbam1d(x, w1_t, w2_t, w_conv))
    assert out.shape == (B, C)
    assert jnp.allclose(out, ref, atol=1e-5, rtol=1e-5), "matmul-conv path mismatch"

    # roll-based spatial attention (auto-selected for large C); forced here for coverage
    out_roll = jax.block_until_ready(cbam1d(x, w1_t, w2_t, w_conv, use_roll_conv=True))
    assert jnp.allclose(out_roll, ref, atol=1e-5, rtol=1e-5), "roll-conv path mismatch"

    # bf16 inputs exercise the bf16-MXU path (f32 accumulation); loose tolerance vs f32 ref
    out_bf16 = jax.block_until_ready(
        cbam1d(x.astype(jnp.bfloat16), w1_t, w2_t, w_conv))
    assert jnp.allclose(out_bf16.astype(jnp.float32), ref, atol=1e-1, rtol=1e-1), \
        "bf16 path mismatch"

    print("KERNEL_OK")
</pallas_src>

<mosaic_0001>
module attributes {stable_mosaic.version = 11 : i64} {
  func.func @cbam1d_matmul_kernel(%arg0: i32, %arg1: memref<8x128xf32, #tpu.memory_space<vmem>>, %arg2: memref<128x8xf32, #tpu.memory_space<vmem>>, %arg3: memref<8x128xf32, #tpu.memory_space<vmem>>, %arg4: memref<128x128xf32, #tpu.memory_space<vmem>>, %arg5: memref<8x128xf32, #tpu.memory_space<vmem>>) attributes {dimension_semantics = [#tpu.dimension_semantics<parallel>], iteration_bounds = array<i64: 2>, scalar_prefetch = 0 : i64, scratch_operands = 0 : i64, tpu.core_type = #tpu.core_type<tc>, window_params = [{transform_indices = @transform_0, window_bounds = array<i64: 8, 128>}, {pipeline_mode = #tpu.pipeline_mode<synchronous>, transform_indices = @transform_1, window_bounds = array<i64: 128, 8>}, {pipeline_mode = #tpu.pipeline_mode<synchronous>, transform_indices = @transform_2, window_bounds = array<i64: 8, 128>}, {pipeline_mode = #tpu.pipeline_mode<synchronous>, transform_indices = @transform_3, window_bounds = array<i64: 128, 128>}, {transform_indices = @transform_4, window_bounds = array<i64: 8, 128>}]} {
    %c0 = arith.constant 0 : index
    %c0_0 = arith.constant 0 : index
    %0 = vector.load %arg1[%c0, %c0_0] : memref<8x128xf32, #tpu.memory_space<vmem>>, vector<8x128xf32>
    %c0_1 = arith.constant 0 : index
    %c0_2 = arith.constant 0 : index
    %1 = vector.load %arg2[%c0_1, %c0_2] : memref<128x8xf32, #tpu.memory_space<vmem>>, vector<128x8xf32>
    %cst = arith.constant dense<0.000000e+00> : vector<8x8xf32>
    %2 = tpu.matmul %0, %1, %cst {dimension_numbers = #tpu.dot_dimension_numbers<[1], [0], [0], [1], [0, 0, 1, 1], [], []>} : vector<8x128xf32>, vector<128x8xf32>, vector<8x8xf32> -> vector<8x8xf32>
    %cst_3 = arith.constant 0.000000e+00 : f32
    %3 = vector.broadcast %cst_3 : f32 to vector<8x8xf32>
    %4 = arith.maximumf %2, %3 : vector<8x8xf32>
    %c0_4 = arith.constant 0 : index
    %c0_5 = arith.constant 0 : index
    %5 = vector.load %arg3[%c0_4, %c0_5] : memref<8x128xf32, #tpu.memory_space<vmem>>, vector<8x128xf32>
    %cst_6 = arith.constant dense<0.000000e+00> : vector<8x128xf32>
    %6 = tpu.matmul %4, %5, %cst_6 {dimension_numbers = #tpu.dot_dimension_numbers<[1], [0], [0], [1], [0, 0, 1, 1], [], []>} : vector<8x8xf32>, vector<8x128xf32>, vector<8x128xf32> -> vector<8x128xf32>
    %7 = arith.negf %6 : vector<8x128xf32>
    %8 = math.exp %7 : vector<8x128xf32>
    %cst_7 = arith.constant 1.000000e+00 : f32
    %9 = vector.broadcast %cst_7 : f32 to vector<8x128xf32>
    %10 = arith.addf %9, %8 : vector<8x128xf32>
    %11 = arith.divf %9, %10 : vector<8x128xf32>
    %12 = arith.addf %11, %11 : vector<8x128xf32>
    %13 = arith.mulf %0, %12 : vector<8x128xf32>
    %c0_8 = arith.constant 0 : index
    %c0_9 = arith.constant 0 : index
    %14 = vector.load %arg4[%c0_8, %c0_9] : memref<128x128xf32, #tpu.memory_space<vmem>>, vector<128x128xf32>
    %cst_10 = arith.constant dense<0.000000e+00> : vector<8x128xf32>
    %15 = tpu.matmul %13, %14, %cst_10 {dimension_numbers = #tpu.dot_dimension_numbers<[1], [0], [0], [1], [0, 0, 1, 1], [], []>} : vector<8x128xf32>, vector<128x128xf32>, vector<8x128xf32> -> vector<8x128xf32>
    %16 = arith.negf %15 : vector<8x128xf32>
    %17 = math.exp %16 : vector<8x128xf32>
    %cst_11 = arith.constant 1.000000e+00 : f32
    %18 = vector.broadcast %cst_11 : f32 to vector<8x128xf32>
    %19 = arith.addf %18, %17 : vector<8x128xf32>
    %20 = arith.divf %18, %19 : vector<8x128xf32>
    %21 = arith.mulf %13, %20 : vector<8x128xf32>
    %c0_12 = arith.constant 0 : index
    %c0_13 = arith.constant 0 : index
    %22 = vector.load %arg5[%c0_12, %c0_13] : memref<8x128xf32, #tpu.memory_space<vmem>>, vector<8x128xf32>
    tpu.vector_store %arg5[%c0_12, %c0_13], %21 {strides = array<i32>} : memref<8x128xf32, #tpu.memory_space<vmem>>, vector<8x128xf32>,
    return
  }
  func.func @transform_0(%arg0: i32) -> (i32, i32) {
    %c0_i32 = arith.constant 0 : i32
    %c0_i32_0 = arith.constant 0 : i32
    return %arg0, %c0_i32 : i32, i32
  }
  func.func @transform_1(%arg0: i32) -> (i32, i32) {
    %c0_i32 = arith.constant 0 : i32
    %c0_i32_0 = arith.constant 0 : i32
    %c0_i32_1 = arith.constant 0 : i32
    return %c0_i32, %c0_i32_0 : i32, i32
  }
  func.func @transform_2(%arg0: i32) -> (i32, i32) {
    %c0_i32 = arith.constant 0 : i32
    %c0_i32_0 = arith.constant 0 : i32
    %c0_i32_1 = arith.constant 0 : i32
    return %c0_i32, %c0_i32_0 : i32, i32
  }
  func.func @transform_3(%arg0: i32) -> (i32, i32) {
    %c0_i32 = arith.constant 0 : i32
    %c0_i32_0 = arith.constant 0 : i32
    %c0_i32_1 = arith.constant 0 : i32
    return %c0_i32, %c0_i32_0 : i32, i32
  }
  func.func @transform_4(%arg0: i32) -> (i32, i32) {
    %c0_i32 = arith.constant 0 : i32
    %c0_i32_0 = arith.constant 0 : i32
    return %arg0, %c0_i32 : i32, i32
  }
}

</mosaic_0001>

<llo_original>
// kernel: tpu_custom_call.1
$region0: #{tpu_custom_call.1}
  #allocation0 [shape = 'u32[]', space=smem, size = 0x4, offset = 0x4, fixed_abs, tag = 'smem constant byte address 0x4 - core index']
  #allocation1 [shape = 'u32[144,128]{1,0:T(1,128)}', space=vmem, size = 0x12000, scoped, tag = 'internal scratch']
  %s0 = inlined_call_operand.hbm [shape: f32[16,128], index: 0, kind: input, shape index: {}]
  %s1 = inlined_call_operand.vmem [shape: f32[128,8], index: 1, kind: input, shape index: {}]
  %s2 = inlined_call_operand.vmem [shape: f32[8,128], index: 2, kind: input, shape index: {}]
  %s3 = inlined_call_operand.vmem [shape: f32[128,128], index: 3, kind: input, shape index: {}]
  %s4 = inlined_call_operand.hbm [shape: f32[16,128], index: 4, kind: output, shape index: {}]
  %s5 = sld [smem:[#allocation0]]
  $region53: #{tpu_custom_call.1} parent=0
    _
  %s7 = ssub.s32 1, %s5
  %s8 = scalar_select 0, %s7, %s5
  $region1: #{tpu_custom_call.1} parent=0
    #allocation2 [shape = 'u8[8192]{0}', space=vmem, size = 0x2000, scoped, tag = 'input window, operand 0']
    #allocation3 [shape = 's32[2]{0}', space=sflag, size = 0x8, scoped, tag = 'scoped memory for tpu_custom_call.1']
    #allocation4 [shape = 's32[2]{0}', space=sflag, size = 0x8, scoped, tag = 'scoped memory for tpu_custom_call.1']
    #allocation5 [shape = 'u8[8192]{0}', space=vmem, size = 0x2000, scoped, tag = 'output window, operand 0']
    %9 = vsyncpa [#allocation3], 0
    %s10 = scalar_lea.sflag [#allocation3], 1
    %11 = vsyncpa %s10, 0
    %12 = vsyncpa [#allocation4], 0
    %s13 = scalar_lea.sflag [#allocation4], 1
    %14 = vsyncpa %s13, 0
    loop: start=0, step=1, limit=4
    $region2: #{tpu_custom_call.1} parent=1 // loop_pre_header
      _
    $region3: #{tpu_custom_call.1} parent=1 // loop_header
      %s16 = sphi 0, %s20
      %p17 = scmp.ge.s32.totalorder %s16, 4
      %s26 = sphi 0, %s28
      %s29 = sphi 0, %s26
      %s30 = sphi 0, %s29
      %s46 = sphi 0, %s30
      %s50 = sphi 0, %s50
      %s52 = sphi 0, %s50
      %s53 = sphi 0, %s52
      %s67 = sphi 0, %s53
      %s71 = sphi 0, %s71
      %s73 = sphi 0, %s71
      %s74 = sphi 0, %s73
      %s88 = sphi 0, %s74
      %s92 = sphi 0, %s92
      %s94 = sphi 0, %s92
      %s95 = sphi 0, %s94
      %s109 = sphi 0, %s95
      %s115 = sphi 0, %s117
      %s118 = sphi 0, %s115
      %s119 = sphi 0, %s118
      %s135 = sphi 0, %s119
    $region4: #{tpu_custom_call.1} parent=1 // loop_header_branch
      %19 = sbr.rel (%p17) target = $region8
    $region5: #{tpu_custom_call.1} parent=1 // loop_body
      %s21 = ssub.s32 %s16, 1
      %s22 = ssub.s32 %s16, 2
      %s23 = sadd.s32 %s16, 1
      %s24 = ssub.s32 %s16, %s23
      %p25 = scmp.eq.s32.totalorder %s24, 0
      %s27 = sadd.s32 %s26, 1
      %s28 = scalar_select %p25, %s26, %s27
      %p31 = pneg %p25
      %p32 = scmp.eq.s32.totalorder %s16, 1
      %p33 = por %p31, %p32
      %p34 = scmp.ne.s32.totalorder %s26, %s29
      %p35 = scmp.eq.s32.totalorder %s16, 0
      %p36 = por %p34, %p35
      %p37 = scmp.ne.s32.totalorder %s26, %s29
      %p38 = scmp.eq.s32.totalorder %s21, 1
      %p39 = por %p37, %p38
      %p40 = scmp.ne.s32.totalorder %s29, %s30
      %p41 = scmp.eq.s32.totalorder %s21, 0
      %p42 = por %p40, %p41
      %p43 = scmp.ne.s32.totalorder %s29, %s30
      %p44 = scmp.eq.s32.totalorder %s22, 1
      %p45 = por %p43, %p44
      %p47 = scmp.ne.s32.totalorder %s30, %s46
      %p48 = scmp.eq.s32.totalorder %s22, 0
      %p49 = por %p47, %p48
      %s51 = sadd.s32 %s50, 1
      %p54 = scmp.eq.s32.totalorder %s16, 1
      %p55 = scmp.ne.s32.totalorder %s50, %s52
      %p56 = scmp.eq.s32.totalorder %s16, 0
      %p57 = por %p55, %p56
      %p58 = scmp.ne.s32.totalorder %s50, %s52
      %p59 = scmp.eq.s32.totalorder %s21, 1
      %p60 = por %p58, %p59
      %p61 = scmp.ne.s32.totalorder %s52, %s53
      %p62 = scmp.eq.s32.totalorder %s21, 0
      %p63 = por %p61, %p62
      %p64 = scmp.ne.s32.totalorder %s52, %s53
      %p65 = scmp.eq.s32.totalorder %s22, 1
      %p66 = por %p64, %p65
      %p68 = scmp.ne.s32.totalorder %s53, %s67
      %p69 = scmp.eq.s32.totalorder %s22, 0
      %p70 = por %p68, %p69
      %s72 = sadd.s32 %s71, 1
      %p75 = scmp.eq.s32.totalorder %s16, 1
      %p76 = scmp.ne.s32.totalorder %s71, %s73
      %p77 = scmp.eq.s32.totalorder %s16, 0
      %p78 = por %p76, %p77
      %p79 = scmp.ne.s32.totalorder %s71, %s73
      %p80 = scmp.eq.s32.totalorder %s21, 1
      %p81 = por %p79, %p80
      %p82 = scmp.ne.s32.totalorder %s73, %s74
      %p83 = scmp.eq.s32.totalorder %s21, 0
      %p84 = por %p82, %p83
      %p85 = scmp.ne.s32.totalorder %s73, %s74
      %p86 = scmp.eq.s32.totalorder %s22, 1
      %p87 = por %p85, %p86
      %p89 = scmp.ne.s32.totalorder %s74, %s88
      %p90 = scmp.eq.s32.totalorder %s22, 0
      %p91 = por %p89, %p90
      %s93 = sadd.s32 %s92, 1
      %p96 = scmp.eq.s32.totalorder %s16, 1
      %p97 = scmp.ne.s32.totalorder %s92, %s94
      %p98 = scmp.eq.s32.totalorder %s16, 0
      %p99 = por %p97, %p98
      %p100 = scmp.ne.s32.totalorder %s92, %s94
      %p101 = scmp.eq.s32.totalorder %s21, 1
      %p102 = por %p100, %p101
      %p103 = scmp.ne.s32.totalorder %s94, %s95
      %p104 = scmp.eq.s32.totalorder %s21, 0
      %p105 = por %p103, %p104
      %p106 = scmp.ne.s32.totalorder %s94, %s95
      %p107 = scmp.eq.s32.totalorder %s22, 1
      %p108 = por %p106, %p107
      %p110 = scmp.ne.s32.totalorder %s95, %s109
      %p111 = scmp.eq.s32.totalorder %s22, 0
      %p112 = por %p110, %p111
      %s113 = ssub.s32 %s16, %s23
      %p114 = scmp.eq.s32.totalorder %s113, 0
      %s116 = sadd.s32 %s115, 1
      %s117 = scalar_select %p114, %s115, %s116
      %p120 = pneg %p114
      %p121 = scmp.eq.s32.totalorder %s16, 1
      %p122 = por %p120, %p121
      %p123 = scmp.ne.s32.totalorder %s115, %s118
      %p124 = scmp.eq.s32.totalorder %s16, 0
      %p125 = por %p123, %p124
      %p126 = scmp.ne.s32.totalorder %s115, %s118
      %p127 = scmp.eq.s32.totalorder %s21, 1
      %p128 = por %p126, %p127
      %p129 = scmp.ne.s32.totalorder %s118, %s119
      %p130 = scmp.eq.s32.totalorder %s21, 0
      %p131 = por %p129, %p130
      %p132 = scmp.ne.s32.totalorder %s118, %s119
      %p133 = scmp.eq.s32.totalorder %s22, 1
      %p134 = por %p132, %p133
      %p136 = scmp.ne.s32.totalorder %s119, %s135
      %p137 = scmp.eq.s32.totalorder %s22, 0
      %p138 = por %p136, %p137
      %p139 = scmp.le.s32.totalorder 1, %s16
      %p140 = scmp.lt.s32.totalorder %s16, 3
      %p141 = pnand %p139, %p140
      %p142 = pneg %p141
      // Predicated region
      $region9: #{tpu_custom_call.1} parent=5 // pred_check
        _
      $region10: #{tpu_custom_call.1} parent=5 // pred_check_branch
        %144 = sbr.rel (%p141) target = $region12
      $region11: #{tpu_custom_call.1} parent=5 // pred_region
        %s145 = ssub.s32 %s16, 1
        // Predicated region
        $region13: #{tpu_custom_call.1} parent=11 // pred_check
          %p146 = pneg %p63
        $region14: #{tpu_custom_call.1} parent=11 // pred_check_branch
          %148 = sbr.rel (%p146) target = $region16
        $region15: #{tpu_custom_call.1} parent=11 // pred_region
          _
        $region16: #{tpu_custom_call.1} parent=11 // pred_fallthru
          _
        // Predicated region
        $region17: #{tpu_custom_call.1} parent=11 // pred_check
          %p149 = pneg %p84
        $region18: #{tpu_custom_call.1} parent=11 // pred_check_branch
          %151 = sbr.rel (%p149) target = $region20
        $region19: #{tpu_custom_call.1} parent=11 // pred_region
          _
        $region20: #{tpu_custom_call.1} parent=11 // pred_fallthru
          _
        // Predicated region
        $region21: #{tpu_custom_call.1} parent=11 // pred_check
          %p152 = pneg %p105
        $region22: #{tpu_custom_call.1} parent=11 // pred_check_branch
          %154 = sbr.rel (%p152) target = $region24
        $region23: #{tpu_custom_call.1} parent=11 // pred_region
          _
        $region24: #{tpu_custom_call.1} parent=11 // pred_fallthru
          _
      $region12: #{tpu_custom_call.1} parent=5 // pred_fallthru
        _
      %p155 = scmp.lt.s32.totalorder %s16, 2
      // Predicated region
      $region25: #{tpu_custom_call.1} parent=5 // pred_check
        %p156 = pneg %p155
      $region26: #{tpu_custom_call.1} parent=5 // pred_check_branch
        %158 = sbr.rel (%p156) target = $region28
      $region27: #{tpu_custom_call.1} parent=5 // pred_region
        // Predicated region
        $region29: #{tpu_custom_call.1} parent=27 // pred_check
          %p159 = pneg %p36
        $region30: #{tpu_custom_call.1} parent=27 // pred_check_branch
          %161 = sbr.rel (%p159) target = $region32
        $region31: #{tpu_custom_call.1} parent=27 // pred_region
          %s162 = sand.u32 %s26, 1
          %s163 = scalar_lea.sflag [#allocation3], %s162
          %s164 = sand.u32 %s26, 1
          %s165 = smul.addr %s164, 8
          %s166 = scalar_lea.vmem [#allocation2], %s165
          %s168 = ssub.s32 128, 128
          %169 = vsyncadd %s163, %s168
          %s170 = smul.addr %s16, 128
          %s171 = scalar_lea.hbm %s0, %s170
          %s173 = sshll.u32 %s166, 4
          %s174 = int_to_ptr.vmem [resolvable:$true] %s173
          %176 = dma.hbm_to_vmem [thread:$0]  %s171, 128, %s174, %s163
        $region32: #{tpu_custom_call.1} parent=27 // pred_fallthru
          _
      $region28: #{tpu_custom_call.1} parent=5 // pred_fallthru
        _
      %p177 = scmp.le.s32.totalorder 1, %s16
      %p178 = scmp.lt.s32.totalorder %s16, 3
      %p179 = pnand %p177, %p178
      %p180 = pneg %p179
      // Predicated region
      $region33: #{tpu_custom_call.1} parent=5 // pred_check
        _
      $region34: #{tpu_custom_call.1} parent=5 // pred_check_branch
        %182 = sbr.rel (%p179) target = $region36
      $region35: #{tpu_custom_call.1} parent=5 // pred_region
        %s183 = ssub.s32 %s16, 1
        %s184 = sand.u32 %s29, 1
        %s185 = scalar_lea.sflag [#allocation3], %s184
        %s186 = sand.u32 %s29, 1
        %s187 = smul.addr %s186, 8
        %s188 = scalar_lea.vmem [#allocation2], %s187
        // Predicated region
        $region37: #{tpu_custom_call.1} parent=35 // pred_check
          %p189 = pneg %p42
        $region38: #{tpu_custom_call.1} parent=35 // pred_check_branch
          %191 = sbr.rel (%p189) target = $region40
        $region39: #{tpu_custom_call.1} parent=35 // pred_region
          %192 = dma.done %s185, 128
        $region40: #{tpu_custom_call.1} parent=35 // pred_fallthru
          _
        %s193 = sand.u32 %s29, 1
        %s194 = scalar_lea.sflag [#allocation3], %s193
        %s195 = sand.u32 %s29, 1
        %s196 = smul.addr %s195, 8
        %s197 = scalar_lea.vmem [#allocation2], %s196
        %p198 = pneg %p42
        %p199 = pneg %p39
        %p200 = pneg %p63
        %p201 = pneg %p60
        %p202 = pneg %p84
        %p203 = pneg %p81
        %p204 = pneg %p105
        %p205 = pneg %p102
        %p206 = pneg %p131
        %p207 = pneg %p128
        %s208 = sand.u32 %s118, 1
        %s209 = scalar_lea.sflag [#allocation4], %s208
        %s210 = sand.u32 %s118, 1
        %s211 = smul.addr %s210, 8
        %s212 = scalar_lea.vmem [#allocation5], %s211
        %v213 = vld [vmem:[%s188] sm:$0xff]
        %v214 = vld [vmem:[%s1] sm:$0xff]
        %v215 = vld [vmem:[%s1 + $0x8] sm:$0xff]
        %v216 = vld [vmem:[%s1 + $0x10] sm:$0xff]
        %v217 = vld [vmem:[%s1 + $0x18] sm:$0xff]
        %v218 = vld [vmem:[%s1 + $0x20] sm:$0xff]
        %v219 = vld [vmem:[%s1 + $0x28] sm:$0xff]
        %v220 = vld [vmem:[%s1 + $0x30] sm:$0xff]
        %v221 = vld [vmem:[%s1 + $0x38] sm:$0xff]
        %v222 = vld [vmem:[%s1 + $0x40] sm:$0xff]
        %v223 = vld [vmem:[%s1 + $0x48] sm:$0xff]
        %v224 = vld [vmem:[%s1 + $0x50] sm:$0xff]
        %v225 = vld [vmem:[%s1 + $0x58] sm:$0xff]
        %v226 = vld [vmem:[%s1 + $0x60] sm:$0xff]
        %v227 = vld [vmem:[%s1 + $0x68] sm:$0xff]
        %v228 = vld [vmem:[%s1 + $0x70] sm:$0xff]
        %v229 = vld [vmem:[%s1 + $0x78] sm:$0xff]
        %230 = vmatprep.subr.mxu0 0.0
        %231 = vmatpush1.msra.mxu0 %v229
        %232 = vmatprep.subr.mxu0 0.0
        %233 = vmatpush1.msra.mxu0 %v228
        %234 = vmatprep.subr.mxu0 0.0
        %235 = vmatpush1.msra.mxu0 %v227
        %236 = vmatprep.subr.mxu0 0.0
        %237 = vmatpush1.msra.mxu0 %v226
        %238 = vmatprep.subr.mxu0 0.0
        %239 = vmatpush1.msra.mxu0 %v225
        %240 = vmatprep.subr.mxu0 0.0
        %241 = vmatpush1.msra.mxu0 %v224
        %242 = vmatprep.subr.mxu0 0.0
        %243 = vmatpush1.msra.mxu0 %v223
        %244 = vmatprep.subr.mxu0 0.0
        %245 = vmatpush1.msra.mxu0 %v222
        %246 = vmatprep.subr.mxu0 0.0
        %247 = vmatpush1.msra.mxu0 %v221
        %248 = vmatprep.subr.mxu0 0.0
        %249 = vmatpush1.msra.mxu0 %v220
        %250 = vmatprep.subr.mxu0 0.0
        %251 = vmatpush1.msra.mxu0 %v219
        %252 = vmatprep.subr.mxu0 0.0
        %253 = vmatpush1.msra.mxu0 %v218
        %254 = vmatprep.subr.mxu0 0.0
        %255 = vmatpush1.msra.mxu0 %v217
        %256 = vmatprep.subr.mxu0 0.0
        %257 = vmatpush1.msra.mxu0 %v216
        %258 = vmatprep.subr.mxu0 0.0
        %259 = vmatpush1.msra.mxu0 %v215
        %260 = vmatprep.subr.mxu0 0.0
        %261 = vmatpush1.msra.mxu0 %v214
        %262 = vmatprep.subr.mxu0 0.0
        %263 = vmatpush2.msra.mxu0 0.0
        %264 = vmatprep.subr.mxu0 0.0
        %265 = vmatpush2.msra.mxu0 0.0
        %266 = vmatprep.subr.mxu0 0.0
        %267 = vmatpush2.msra.mxu0 0.0
        %268 = vmatprep.subr.mxu0 0.0
        %269 = vmatpush2.msra.mxu0 0.0
        %270 = vmatprep.subr.mxu0 0.0
        %271 = vmatpush2.msra.mxu0 0.0
        %272 = vmatprep.subr.mxu0 0.0
        %273 = vmatpush2.msra.mxu0 0.0
        %274 = vmatprep.subr.mxu0 0.0
        %275 = vmatpush2.msra.mxu0 0.0
        %276 = vmatprep.subr.mxu0 0.0
        %277 = vmatpush2.msra.mxu0 0.0
        %278 = vmatprep.subr.mxu0 0.0
        %279 = vmatpush2.msra.mxu0 0.0
        %280 = vmatprep.subr.mxu0 0.0
        %281 = vmatpush2.msra.mxu0 0.0
        %282 = vmatprep.subr.mxu0 0.0
        %283 = vmatpush2.msra.mxu0 0.0
        %284 = vmatprep.subr.mxu0 0.0
        %285 = vmatpush2.msra.mxu0 0.0
        %286 = vmatprep.subr.mxu0 0.0
        %287 = vmatpush2.msra.mxu0 0.0
        %288 = vmatprep.subr.mxu0 0.0
        %289 = vmatpush2.msra.mxu0 0.0
        %290 = vmatprep.subr.mxu0 0.0
        %291 = vmatpush2.msra.mxu0 0.0
        %292 = vmatprep.subr.mxu0 0.0
        %293 = vmatpush2.msra.mxu0 0.0
        %294 = vmatprep.mubr.f32.mxu0 0.0
        %295 = vmatmul.mubr.f32.gmra.mxu0 %v213
        %v296 = vpop.f32.mrf.mxu0
        %v297 = vadd.f32 0.0, %v296
        %v298 = vpop.f32.mrf.mxu0
        %299 = vdwg.mxu0
        %v300 = vmax.f32 %v297, 0.0
        %v301 = vld [vmem:[%s2] sm:$0xff]
        %vm302 = vcmask 64512
        %v304 = vsel %vm302, %v300, 0
        %306 = vmatprep.subr.mxu0 0.0
        %307 = vmatpush1.msra.mxu0 0.0
        %308 = vmatprep.subr.mxu0 0.0
        %309 = vmatpush1.msra.mxu0 0.0
        %310 = vmatprep.subr.mxu0 0.0
        %311 = vmatpush1.msra.mxu0 0.0
        %312 = vmatprep.subr.mxu0 0.0
        %313 = vmatpush1.msra.mxu0 0.0
        %314 = vmatprep.subr.mxu0 0.0
        %315 = vmatpush1.msra.mxu0 0.0
        %316 = vmatprep.subr.mxu0 0.0
        %317 = vmatpush1.msra.mxu0 0.0
        %318 = vmatprep.subr.mxu0 0.0
        %319 = vmatpush1.msra.mxu0 0.0
        %320 = vmatprep.subr.mxu0 0.0
        %321 = vmatpush1.msra.mxu0 0.0
        %322 = vmatprep.subr.mxu0 0.0
        %323 = vmatpush1.msra.mxu0 0.0
        %324 = vmatprep.subr.mxu0 0.0
        %325 = vmatpush1.msra.mxu0 0.0
        %326 = vmatprep.subr.mxu0 0.0
        %327 = vmatpush1.msra.mxu0 0.0
        %328 = vmatprep.subr.mxu0 0.0
        %329 = vmatpush1.msra.mxu0 0.0
        %330 = vmatprep.subr.mxu0 0.0
        %331 = vmatpush1.msra.mxu0 0.0
        %332 = vmatprep.subr.mxu0 0.0
        %333 = vmatpush1.msra.mxu0 0.0
        %334 = vmatprep.subr.mxu0 0.0
        %335 = vmatpush1.msra.mxu0 0.0
        %336 = vmatprep.subr.mxu0 0.0
        %337 = vmatpush1.msra.mxu0 %v301
        %338 = vmatprep.subr.mxu0 0.0
        %339 = vmatpush2.msra.mxu0 0.0
        %340 = vmatprep.subr.mxu0 0.0
        %341 = vmatpush2.msra.mxu0 0.0
        %342 = vmatprep.subr.mxu0 0.0
        %343 = vmatpush2.msra.mxu0 0.0
        %344 = vmatprep.subr.mxu0 0.0
        %345 = vmatpush2.msra.mxu0 0.0
        %346 = vmatprep.subr.mxu0 0.0
        %347 = vmatpush2.msra.mxu0 0.0
        %348 = vmatprep.subr.mxu0 0.0
        %349 = vmatpush2.msra.mxu0 0.0
        %350 = vmatprep.subr.mxu0 0.0
        %351 = vmatpush2.msra.mxu0 0.0
        %352 = vmatprep.subr.mxu0 0.0
        %353 = vmatpush2.msra.mxu0 0.0
        %354 = vmatprep.subr.mxu0 0.0
        %355 = vmatpush2.msra.mxu0 0.0
        %356 = vmatprep.subr.mxu0 0.0
        %357 = vmatpush2.msra.mxu0 0.0
        %358 = vmatprep.subr.mxu0 0.0
        %359 = vmatpush2.msra.mxu0 0.0
        %360 = vmatprep.subr.mxu0 0.0
        %361 = vmatpush2.msra.mxu0 0.0
        %362 = vmatprep.subr.mxu0 0.0
        %363 = vmatpush2.msra.mxu0 0.0
        %364 = vmatprep.subr.mxu0 0.0
        %365 = vmatpush2.msra.mxu0 0.0
        %366 = vmatprep.subr.mxu0 0.0
        %367 = vmatpush2.msra.mxu0 0.0
        %368 = vmatprep.subr.mxu0 0.0
        %369 = vmatpush2.msra.mxu0 0.0
        %370 = vmatprep.mubr.f32.mxu0 0.0
        %371 = vmatmul.mubr.f32.gmra.mxu0 %v304
        %v372 = vpop.f32.mrf.mxu0
        %v373 = vadd.f32 0.0, %v372
        %v374 = vpop.f32.mrf.mxu0
        %375 = vdwg.mxu0
        %v376 = vxor.u32 %v373, 2147483648
        %v377 = vmul.f32 %v376, 1.442695
        %v378 = vpow.pop %v377
        %v379 = vadd.f32 %v378, 1.0
        %v380 = vrcp.pop %v379
        %v381 = vmul.f32 1.0, %v380
        %v382 = vadd.f32 %v381, %v381
        %v383 = vmul.f32 %v213, %v382
        %v384 = vld [vmem:[%s3] sm:$0xff]
        %v385 = vld [vmem:[%s3 + $0x8] sm:$0xff]
        %v386 = vld [vmem:[%s3 + $0x10] sm:$0xff]
        %v387 = vld [vmem:[%s3 + $0x18] sm:$0xff]
        %v388 = vld [vmem:[%s3 + $0x20] sm:$0xff]
        %v389 = vld [vmem:[%s3 + $0x28] sm:$0xff]
        %v390 = vld [vmem:[%s3 + $0x30] sm:$0xff]
        %v391 = vld [vmem:[%s3 + $0x38] sm:$0xff]
        %v392 = vld [vmem:[%s3 + $0x40] sm:$0xff]
        %v393 = vld [vmem:[%s3 + $0x48] sm:$0xff]
        %v394 = vld [vmem:[%s3 + $0x50] sm:$0xff]
        %v395 = vld [vmem:[%s3 + $0x58] sm:$0xff]
        %v396 = vld [vmem:[%s3 + $0x60] sm:$0xff]
        %v397 = vld [vmem:[%s3 + $0x68] sm:$0xff]
        %v398 = vld [vmem:[%s3 + $0x70] sm:$0xff]
        %v399 = vld [vmem:[%s3 + $0x78] sm:$0xff]
        %400 = vmatprep.subr.mxu0 0.0
        %401 = vmatpush1.msra.mxu0 %v399
        %402 = vmatprep.subr.mxu0 0.0
        %403 = vmatpush1.msra.mxu0 %v398
        %404 = vmatprep.subr.mxu0 0.0
        %405 = vmatpush1.msra.mxu0 %v397
        %406 = vmatprep.subr.mxu0 0.0
        %407 = vmatpush1.msra.mxu0 %v396
        %408 = vmatprep.subr.mxu0 0.0
        %409 = vmatpush1.msra.mxu0 %v395
        %410 = vmatprep.subr.mxu0 0.0
        %411 = vmatpush1.msra.mxu0 %v394
        %412 = vmatprep.subr.mxu0 0.0
        %413 = vmatpush1.msra.mxu0 %v393
        %414 = vmatprep.subr.mxu0 0.0
        %415 = vmatpush1.msra.mxu0 %v392
        %416 = vmatprep.subr.mxu0 0.0
        %417 = vmatpush1.msra.mxu0 %v391
        %418 = vmatprep.subr.mxu0 0.0
        %419 = vmatpush1.msra.mxu0 %v390
        %420 = vmatprep.subr.mxu0 0.0
        %421 = vmatpush1.msra.mxu0 %v389
        %422 = vmatprep.subr.mxu0 0.0
        %423 = vmatpush1.msra.mxu0 %v388
        %424 = vmatprep.subr.mxu0 0.0
        %425 = vmatpush1.msra.mxu0 %v387
        %426 = vmatprep.subr.mxu0 0.0
        %427 = vmatpush1.msra.mxu0 %v386
        %428 = vmatprep.subr.mxu0 0.0
        %429 = vmatpush1.msra.mxu0 %v385
        %430 = vmatprep.subr.mxu0 0.0
        %431 = vmatpush1.msra.mxu0 %v384
        %432 = vmatprep.subr.mxu0 0.0
        %433 = vmatpush2.msra.mxu0 0.0
        %434 = vmatprep.subr.mxu0 0.0
        %435 = vmatpush2.msra.mxu0 0.0
        %436 = vmatprep.subr.mxu0 0.0
        %437 = vmatpush2.msra.mxu0 0.0
        %438 = vmatprep.subr.mxu0 0.0
        %439 = vmatpush2.msra.mxu0 0.0
        %440 = vmatprep.subr.mxu0 0.0
        %441 = vmatpush2.msra.mxu0 0.0
        %442 = vmatprep.subr.mxu0 0.0
        %443 = vmatpush2.msra.mxu0 0.0
        %444 = vmatprep.subr.mxu0 0.0
        %445 = vmatpush2.msra.mxu0 0.0
        %446 = vmatprep.subr.mxu0 0.0
        %447 = vmatpush2.msra.mxu0 0.0
        %448 = vmatprep.subr.mxu0 0.0
        %449 = vmatpush2.msra.mxu0 0.0
        %450 = vmatprep.subr.mxu0 0.0
        %451 = vmatpush2.msra.mxu0 0.0
        %452 = vmatprep.subr.mxu0 0.0
        %453 = vmatpush2.msra.mxu0 0.0
        %454 = vmatprep.subr.mxu0 0.0
        %455 = vmatpush2.msra.mxu0 0.0
        %456 = vmatprep.subr.mxu0 0.0
        %457 = vmatpush2.msra.mxu0 0.0
        %458 = vmatprep.subr.mxu0 0.0
        %459 = vmatpush2.msra.mxu0 0.0
        %460 = vmatprep.subr.mxu0 0.0
        %461 = vmatpush2.msra.mxu0 0.0
        %462 = vmatprep.subr.mxu0 0.0
        %463 = vmatpush2.msra.mxu0 0.0
        %464 = vmatprep.mubr.f32.mxu0 0.0
        %465 = vmatmul.mubr.f32.gmra.mxu0 %v383
        %v466 = vpop.f32.mrf.mxu0
        %v467 = vadd.f32 0.0, %v466
        %v468 = vpop.f32.mrf.mxu0
        %469 = vdwg.mxu0
        %v470 = vxor.u32 %v467, 2147483648
        %v471 = vmul.f32 %v470, 1.442695
        %v472 = vpow.pop %v471
        %v473 = vadd.f32 %v472, 1.0
        %v474 = vrcp.pop %v473
        %v475 = vmul.f32 1.0, %v474
        %v476 = vmul.f32 %v383, %v475
        %477 = vst [vmem:[%s212] sm:$0xff] %v476
        %s478 = sand.u32 %s118, 1
        %s479 = scalar_lea.sflag [#allocation4], %s478
        %s480 = sand.u32 %s118, 1
        %s481 = smul.addr %s480, 8
        %s482 = scalar_lea.vmem [#allocation5], %s481
        // Predicated region
        $region41: #{tpu_custom_call.1} parent=35 // pred_check
          %p483 = pneg %p128
        $region42: #{tpu_custom_call.1} parent=35 // pred_check_branch
          %485 = sbr.rel (%p483) target = $region44
        $region43: #{tpu_custom_call.1} parent=35 // pred_region
          %s487 = ssub.s32 128, 128
          %488 = vsyncadd %s479, %s487
          %s489 = smul.addr %s21, 128
          %s490 = scalar_lea.hbm %s4, %s489
          %s492 = sshll.u32 %s482, 4
          %s493 = int_to_ptr.vmem [resolvable:$true] %s492
          %495 = dma.vmem_to_hbm [thread:$0]  %s493, 128, %s490, %s479
        $region44: #{tpu_custom_call.1} parent=35 // pred_fallthru
          _
      $region36: #{tpu_custom_call.1} parent=5 // pred_fallthru
        _
      %p496 = scmp.le.s32.totalorder 2, %s16
      // Predicated region
      $region45: #{tpu_custom_call.1} parent=5 // pred_check
        %p497 = pneg %p496
      $region46: #{tpu_custom_call.1} parent=5 // pred_check_branch
        %499 = sbr.rel (%p497) target = $region48
      $region47: #{tpu_custom_call.1} parent=5 // pred_region
        %s500 = ssub.s32 %s16, 2
        // Predicated region
        $region49: #{tpu_custom_call.1} parent=47 // pred_check
          %p501 = pneg %p134
        $region50: #{tpu_custom_call.1} parent=47 // pred_check_branch
          %503 = sbr.rel (%p501) target = $region52
        $region51: #{tpu_custom_call.1} parent=47 // pred_region
          %s504 = sand.u32 %s119, 1
          %s505 = scalar_lea.sflag [#allocation4], %s504
          %s506 = sand.u32 %s119, 1
          %s507 = smul.addr %s506, 8
          %s508 = scalar_lea.vmem [#allocation5], %s507
          %509 = dma.done %s505, 128
        $region52: #{tpu_custom_call.1} parent=47 // pred_fallthru
          _
      $region48: #{tpu_custom_call.1} parent=5 // pred_fallthru
        _
    $region6: #{tpu_custom_call.1} parent=1 // loop_footer
      %s20 = sadd.s32 1, %s16
    $region7: #{tpu_custom_call.1} parent=1 // loop_footer_branch
      %15 = sbr.rel target = $region3
    $region8: #{tpu_custom_call.1} parent=1 // loop_exit
      _
    %510 = vsyncpa [#allocation3], 1
    %s511 = scalar_lea.sflag [#allocation3], 1
    %512 = vsyncpa %s511, 1
    %513 = vsyncpa [#allocation4], 1
    %s514 = scalar_lea.sflag [#allocation4], 1
    %515 = vsyncpa %s514, 1

</llo_original>
